<compile_context>
chip_gen: v6e
topology: v6e:2x2x1
jax: 0.10.0
libtpu: 0.0.40
codegen_flags: <defaults>
</compile_context>

<pallas_src>
import functools

import numpy as np
import jax
import jax.numpy as jnp
from jax.experimental import pallas as pl
from jax.experimental.pallas import tpu as pltpu

EPS = 1e-5


def _round_up(v, m):
    return (v + m - 1) // m * m


def deconv_block_kernel(xg_ref, wdw_ref, b1_ref, wpw_ref, b2_ref, o_ref, *, H, W):
    """One batch element: depthwise ConvT(4,2,1) + BN1 + ReLU6 + 1x1 + BN2 + ReLU6.

    Shapes (channel-major, flat padded spatial on lanes):
      xg_ref : (1, Cin, L)        f32  flat zero-padded input, L = 2*MARGIN + SLAB
      wdw_ref: (16, Cin, 1)       f32  depthwise taps (kh*4+kw major), BN1 scale folded
      b1_ref : (Cin, 1)           f32  BN1 bias
      wpw_ref: (Cout, Cin)        bf16 1x1 conv weight, BN2 scale folded
      b2_ref : (Cout, 1)          f32  BN2 bias
      o_ref  : (1, Cout, 4*SLAB)  f32  four parities stacked along lanes
    """
    W2 = W + 2
    Sp = (H + 2) * W2                      # padded flat spatial size
    SLAB = _round_up(Sp, 128)              # lane-tile aligned parity slab
    MARGIN = W2 + 1                        # max |flat shift|

    xg = xg_ref[0]                         # (Cin, L)
    b1 = b1_ref[...]                       # (Cin, 1)
    wpw = wpw_ref[...]                     # (Cout, Cin) bf16
    b2 = b2_ref[...]                       # (Cout, 1)

    def tap(kh, kw):                       # per-channel scalar tap, (Cin, 1)
        return wdw_ref[kh * 4 + kw]

    def sh(dh, dw):
        # flat view of xp[c, a+dh, b+dw]; correct at every interior position.
        s = MARGIN + dh * W2 + dw          # static python int in [0, 2*MARGIN]
        return xg[:, s:s + SLAB]           # (Cin, SLAB)

    # hoisted shifted views (several are reused across parities)
    x00 = sh(0, 0)
    xm0, x0m = sh(-1, 0), sh(0, -1)
    x0p, xp0 = sh(0, 1), sh(1, 0)
    xmm, xmp = sh(-1, -1), sh(-1, 1)
    xpm, xpp = sh(1, -1), sh(1, 1)

    # ConvTranspose2d(k=4, s=2, p=1) parity (a, b) -> output pixel (2j+a, 2k+b)
    ee = x00 * tap(1, 1) + xm0 * tap(3, 1) + x0m * tap(1, 3) + xmm * tap(3, 3)
    eo = x0p * tap(1, 0) + xmp * tap(3, 0) + x00 * tap(1, 2) + xm0 * tap(3, 2)
    oe = xp0 * tap(0, 1) + x00 * tap(2, 1) + xpm * tap(0, 3) + x0m * tap(2, 3)
    oo = xpp * tap(0, 0) + x0p * tap(2, 0) + xp0 * tap(0, 2) + x00 * tap(2, 2)

    # one BN1-bias + ReLU6 over all four parities (concat offsets are 128-aligned)
    y = jnp.concatenate([ee, eo, oe, oo], axis=-1)            # (Cin, 4*SLAB) f32
    y = jnp.clip(y + b1, 0.0, 6.0).astype(jnp.bfloat16)       # bf16 only for the MXU

    # 1x1 conv over channels: single fused MXU matmul, bf16 in, f32 accumulate.
    z = jnp.dot(wpw, y, preferred_element_type=jnp.float32)   # (Cout, 4*SLAB)
    z = jnp.clip(z + b2, 0.0, 6.0)                            # BN2 bias + ReLU6

    o_ref[0] = z                                              # lane-dense store


@jax.jit
def deconv_block(x_nchw, params):
    """Pallas implementation of DeconvBlock.forward. Input/output are NCHW."""
    N, Cin, H, W = x_nchw.shape
    H2, W2 = H + 2, W + 2
    Sp = H2 * W2
    SLAB = _round_up(Sp, 128)
    MARGIN = W2 + 1
    L = 2 * MARGIN + SLAB

    # ---- parameter folding (outside the hot loop) ----
    s1 = params["bn1_gamma"] * jax.lax.rsqrt(params["bn1_var"] + EPS)
    b1 = (params["bn1_beta"] - params["bn1_mean"] * s1).reshape(Cin, 1)
    b1 = b1.astype(jnp.float32)

    # depthwise ConvTranspose2d weight (Cin,1,4,4) -> (16, Cin, 1), BN1 scale folded.
    wdw = params["dw_weight"][:, 0] * s1.reshape(Cin, 1, 1)            # (Cin,4,4)
    wdw = jnp.transpose(wdw, (1, 2, 0)).reshape(16, Cin, 1).astype(jnp.float32)

    s2 = params["bn2_gamma"] * jax.lax.rsqrt(params["bn2_var"] + EPS)
    b2 = params["bn2_beta"] - params["bn2_mean"] * s2
    Cout = b2.shape[0]
    b2 = b2.reshape(Cout, 1).astype(jnp.float32)
    # 1x1 conv weight (Cout,Cin,1,1) -> (Cout,Cin), BN2 scale folded, bf16 for the MXU.
    wpw = (params["pw_weight"][:, :, 0, 0] * s2.reshape(Cout, 1)).astype(jnp.bfloat16)

    # ---- input glue: stay NCHW, zero-pad, flatten spatial onto the lane axis ----
    x = x_nchw.astype(jnp.float32)
    xp = jnp.pad(x, ((0, 0), (0, 0), (1, 1), (1, 1)))                  # (N,Cin,H2,W2)
    xf = xp.reshape(N, Cin, Sp)
    xg = jnp.pad(xf, ((0, 0), (0, 0), (MARGIN, L - MARGIN - Sp)))      # (N,Cin,L)

    kernel = functools.partial(deconv_block_kernel, H=H, W=W)
    out = pl.pallas_call(
        kernel,
        out_shape=jax.ShapeDtypeStruct((N, Cout, 4 * SLAB), jnp.float32),
        grid=(N,),
        in_specs=[
            pl.BlockSpec((1, Cin, L), lambda n: (n, 0, 0)),
            pl.BlockSpec((16, Cin, 1), lambda n: (0, 0, 0)),
            pl.BlockSpec((Cin, 1), lambda n: (0, 0)),
            pl.BlockSpec((Cout, Cin), lambda n: (0, 0)),
            pl.BlockSpec((Cout, 1), lambda n: (0, 0)),
        ],
        out_specs=pl.BlockSpec((1, Cout, 4 * SLAB), lambda n: (n, 0, 0)),
        compiler_params=pltpu.CompilerParams(
            dimension_semantics=("parallel",),
            vmem_limit_bytes=32 * 1024 * 1024),
    )(xg, wdw, b1, wpw, b2)

    # ---- output glue: single fused slice + transpose interleaving the parities ----
    out = out.reshape(N, Cout, 4, SLAB)[:, :, :, :Sp]                  # drop slab pad
    out = out.reshape(N, Cout, 2, 2, H2, W2)[:, :, :, :, 1:H + 1, 1:W + 1]
    out = jnp.transpose(out, (0, 1, 4, 2, 5, 3))                       # (N,Cout,j,a,k,b)
    return out.reshape(N, Cout, 2 * H, 2 * W)


# ---------------- numpy reference (direct PyTorch semantics) ----------------
def reference(x_nchw, params):
    x = np.asarray(x_nchw, np.float32)
    N, Cin, H, W = x.shape
    wdw = np.asarray(params["dw_weight"], np.float32)   # (Cin, 1, 4, 4)

    # depthwise ConvTranspose2d(k=4, s=2, p=1, groups=Cin)
    out1 = np.zeros((N, Cin, 2 * H, 2 * W), np.float32)
    for hi in range(H):
        for wi in range(W):
            for kh in range(4):
                for kw in range(4):
                    ho = 2 * hi - 1 + kh
                    wo = 2 * wi - 1 + kw
                    if 0 <= ho < 2 * H and 0 <= wo < 2 * W:
                        out1[:, :, ho, wo] += x[:, :, hi, wi] * wdw[:, 0, kh, kw]

    def bn(v, g, b, m, var):
        g, b, m, var = (np.asarray(a, np.float32).reshape(1, -1, 1, 1)
                        for a in (g, b, m, var))
        return (v - m) / np.sqrt(var + EPS) * g + b

    out1 = bn(out1, params["bn1_gamma"], params["bn1_beta"],
              params["bn1_mean"], params["bn1_var"])
    out1 = np.clip(out1, 0.0, 6.0)

    pw = np.asarray(params["pw_weight"], np.float32)[:, :, 0, 0]  # (Cout, Cin)
    out2 = np.einsum("nchw,oc->nohw", out1, pw)
    out2 = bn(out2, params["bn2_gamma"], params["bn2_beta"],
              params["bn2_mean"], params["bn2_var"])
    return np.clip(out2, 0.0, 6.0)


if __name__ == "__main__":
    in_planes, out_planes = 4, 8
    N, H, W = 2, 16, 16

    key = jax.random.PRNGKey(0)
    ks = jax.random.split(key, 11)
    params = dict(
        dw_weight=jax.random.normal(ks[0], (in_planes, 1, 4, 4), jnp.float32) * 0.3,
        bn1_gamma=jax.random.uniform(ks[1], (in_planes,), jnp.float32, 0.5, 1.5),
        bn1_beta=jax.random.normal(ks[2], (in_planes,), jnp.float32) * 0.1,
        bn1_mean=jax.random.normal(ks[3], (in_planes,), jnp.float32) * 0.1,
        bn1_var=jax.random.uniform(ks[4], (in_planes,), jnp.float32, 0.5, 1.5),
        pw_weight=jax.random.normal(ks[5], (out_planes, in_planes, 1, 1),
                                    jnp.float32) * 0.3,
        bn2_gamma=jax.random.uniform(ks[6], (out_planes,), jnp.float32, 0.5, 1.5),
        bn2_beta=jax.random.normal(ks[7], (out_planes,), jnp.float32) * 0.1,
        bn2_mean=jax.random.normal(ks[8], (out_planes,), jnp.float32) * 0.1,
        bn2_var=jax.random.uniform(ks[9], (out_planes,), jnp.float32, 0.5, 1.5),
    )
    x = jax.random.normal(ks[10], (N, in_planes, H, W), jnp.float32)

    out = jax.block_until_ready(deconv_block(x, params))
    assert out.shape == (N, out_planes, 2 * H, 2 * W), out.shape

    ref = reference(x, params)
    # tolerance loosened for the bf16 MXU inputs of the 1x1 conv (f32 accumulate)
    np.testing.assert_allclose(np.asarray(out), ref, rtol=2e-2, atol=5e-2)

    print("KERNEL_OK")
</pallas_src>

<mosaic_0001>
module attributes {stable_mosaic.version = 11 : i64} {
  func.func @deconv_block_kernel(%arg0: i32, %arg1: memref<1x4x422xf32, #tpu.memory_space<vmem>>, %arg2: memref<16x4x1xf32, #tpu.memory_space<vmem>>, %arg3: memref<4x1xf32, #tpu.memory_space<vmem>>, %arg4: memref<8x4xbf16, #tpu.memory_space<vmem>>, %arg5: memref<8x1xf32, #tpu.memory_space<vmem>>, %arg6: memref<1x8x1536xf32, #tpu.memory_space<vmem>>) attributes {dimension_semantics = [#tpu.dimension_semantics<parallel>], iteration_bounds = array<i64: 2>, scalar_prefetch = 0 : i64, scratch_operands = 0 : i64, tpu.core_type = #tpu.core_type<tc>, window_params = [{transform_indices = @transform_0, window_bounds = array<i64: 1, 4, 422>}, {pipeline_mode = #tpu.pipeline_mode<synchronous>, transform_indices = @transform_1, window_bounds = array<i64: 16, 4, 1>}, {pipeline_mode = #tpu.pipeline_mode<synchronous>, transform_indices = @transform_2, window_bounds = array<i64: 4, 1>}, {pipeline_mode = #tpu.pipeline_mode<synchronous>, transform_indices = @transform_3, window_bounds = array<i64: 8, 4>}, {pipeline_mode = #tpu.pipeline_mode<synchronous>, transform_indices = @transform_4, window_bounds = array<i64: 8, 1>}, {transform_indices = @transform_5, window_bounds = array<i64: 1, 8, 1536>}]} {
    %c0 = arith.constant 0 : index
    %c0_0 = arith.constant 0 : index
    %c0_1 = arith.constant 0 : index
    %0 = vector.load %arg1[%c0, %c0_0, %c0_1] : memref<1x4x422xf32, #tpu.memory_space<vmem>>, vector<1x4x422xf32>
    %1 = vector.shape_cast %0 : vector<1x4x422xf32> to vector<4x422xf32>
    %c0_2 = arith.constant 0 : index
    %c0_3 = arith.constant 0 : index
    %2 = vector.load %arg3[%c0_2, %c0_3] : memref<4x1xf32, #tpu.memory_space<vmem>>, vector<4x1xf32>
    %c0_4 = arith.constant 0 : index
    %c0_5 = arith.constant 0 : index
    %3 = vector.load %arg4[%c0_4, %c0_5] : memref<8x4xbf16, #tpu.memory_space<vmem>>, vector<8x4xbf16>
    %c0_6 = arith.constant 0 : index
    %c0_7 = arith.constant 0 : index
    %4 = vector.load %arg5[%c0_6, %c0_7] : memref<8x1xf32, #tpu.memory_space<vmem>>, vector<8x1xf32>
    %5 = vector.extract_strided_slice %1 {offsets = [0, 19], sizes = [4, 384], strides = [1, 1]} : vector<4x422xf32> to vector<4x384xf32>
    %6 = vector.extract_strided_slice %1 {offsets = [0, 1], sizes = [4, 384], strides = [1, 1]} : vector<4x422xf32> to vector<4x384xf32>
    %7 = vector.extract_strided_slice %1 {offsets = [0, 18], sizes = [4, 384], strides = [1, 1]} : vector<4x422xf32> to vector<4x384xf32>
    %8 = vector.extract_strided_slice %1 {offsets = [0, 20], sizes = [4, 384], strides = [1, 1]} : vector<4x422xf32> to vector<4x384xf32>
    %9 = vector.extract_strided_slice %1 {offsets = [0, 37], sizes = [4, 384], strides = [1, 1]} : vector<4x422xf32> to vector<4x384xf32>
    %10 = vector.extract_strided_slice %1 {offsets = [0, 0], sizes = [4, 384], strides = [1, 1]} : vector<4x422xf32> to vector<4x384xf32>
    %11 = vector.extract_strided_slice %1 {offsets = [0, 2], sizes = [4, 384], strides = [1, 1]} : vector<4x422xf32> to vector<4x384xf32>
    %12 = vector.extract_strided_slice %1 {offsets = [0, 36], sizes = [4, 384], strides = [1, 1]} : vector<4x422xf32> to vector<4x384xf32>
    %13 = vector.extract_strided_slice %1 {offsets = [0, 38], sizes = [4, 384], strides = [1, 1]} : vector<4x422xf32> to vector<4x384xf32>
    %c5 = arith.constant 5 : index
    %c0_8 = arith.constant 0 : index
    %c0_9 = arith.constant 0 : index
    %14 = vector.load %arg2[%c5, %c0_8, %c0_9] : memref<16x4x1xf32, #tpu.memory_space<vmem>>, vector<1x4x1xf32>
    %15 = vector.shape_cast %14 : vector<1x4x1xf32> to vector<4x1xf32>
    %16 = vector.broadcast %15 : vector<4x1xf32> to vector<4x384xf32>
    %17 = arith.mulf %5, %16 : vector<4x384xf32>
    %c13 = arith.constant 13 : index
    %c0_10 = arith.constant 0 : index
    %c0_11 = arith.constant 0 : index
    %18 = vector.load %arg2[%c13, %c0_10, %c0_11] : memref<16x4x1xf32, #tpu.memory_space<vmem>>, vector<1x4x1xf32>
    %19 = vector.shape_cast %18 : vector<1x4x1xf32> to vector<4x1xf32>
    %20 = vector.broadcast %19 : vector<4x1xf32> to vector<4x384xf32>
    %21 = arith.mulf %6, %20 : vector<4x384xf32>
    %22 = arith.addf %17, %21 : vector<4x384xf32>
    %c7 = arith.constant 7 : index
    %c0_12 = arith.constant 0 : index
    %c0_13 = arith.constant 0 : index
    %23 = vector.load %arg2[%c7, %c0_12, %c0_13] : memref<16x4x1xf32, #tpu.memory_space<vmem>>, vector<1x4x1xf32>
    %24 = vector.shape_cast %23 : vector<1x4x1xf32> to vector<4x1xf32>
    %25 = vector.broadcast %24 : vector<4x1xf32> to vector<4x384xf32>
    %26 = arith.mulf %7, %25 : vector<4x384xf32>
    %27 = arith.addf %22, %26 : vector<4x384xf32>
    %c15 = arith.constant 15 : index
    %c0_14 = arith.constant 0 : index
    %c0_15 = arith.constant 0 : index
    %28 = vector.load %arg2[%c15, %c0_14, %c0_15] : memref<16x4x1xf32, #tpu.memory_space<vmem>>, vector<1x4x1xf32>
    %29 = vector.shape_cast %28 : vector<1x4x1xf32> to vector<4x1xf32>
    %30 = vector.broadcast %29 : vector<4x1xf32> to vector<4x384xf32>
    %31 = arith.mulf %10, %30 : vector<4x384xf32>
    %32 = arith.addf %27, %31 : vector<4x384xf32>
    %c4 = arith.constant 4 : index
    %c0_16 = arith.constant 0 : index
    %c0_17 = arith.constant 0 : index
    %33 = vector.load %arg2[%c4, %c0_16, %c0_17] : memref<16x4x1xf32, #tpu.memory_space<vmem>>, vector<1x4x1xf32>
    %34 = vector.shape_cast %33 : vector<1x4x1xf32> to vector<4x1xf32>
    %35 = vector.broadcast %34 : vector<4x1xf32> to vector<4x384xf32>
    %36 = arith.mulf %8, %35 : vector<4x384xf32>
    %c12 = arith.constant 12 : index
    %c0_18 = arith.constant 0 : index
    %c0_19 = arith.constant 0 : index
    %37 = vector.load %arg2[%c12, %c0_18, %c0_19] : memref<16x4x1xf32, #tpu.memory_space<vmem>>, vector<1x4x1xf32>
    %38 = vector.shape_cast %37 : vector<1x4x1xf32> to vector<4x1xf32>
    %39 = vector.broadcast %38 : vector<4x1xf32> to vector<4x384xf32>
    %40 = arith.mulf %11, %39 : vector<4x384xf32>
    %41 = arith.addf %36, %40 : vector<4x384xf32>
    %c6 = arith.constant 6 : index
    %c0_20 = arith.constant 0 : index
    %c0_21 = arith.constant 0 : index
    %42 = vector.load %arg2[%c6, %c0_20, %c0_21] : memref<16x4x1xf32, #tpu.memory_space<vmem>>, vector<1x4x1xf32>
    %43 = vector.shape_cast %42 : vector<1x4x1xf32> to vector<4x1xf32>
    %44 = vector.broadcast %43 : vector<4x1xf32> to vector<4x384xf32>
    %45 = arith.mulf %5, %44 : vector<4x384xf32>
    %46 = arith.addf %41, %45 : vector<4x384xf32>
    %c14 = arith.constant 14 : index
    %c0_22 = arith.constant 0 : index
    %c0_23 = arith.constant 0 : index
    %47 = vector.load %arg2[%c14, %c0_22, %c0_23] : memref<16x4x1xf32, #tpu.memory_space<vmem>>, vector<1x4x1xf32>
    %48 = vector.shape_cast %47 : vector<1x4x1xf32> to vector<4x1xf32>
    %49 = vector.broadcast %48 : vector<4x1xf32> to vector<4x384xf32>
    %50 = arith.mulf %6, %49 : vector<4x384xf32>
    %51 = arith.addf %46, %50 : vector<4x384xf32>
    %c1 = arith.constant 1 : index
    %c0_24 = arith.constant 0 : index
    %c0_25 = arith.constant 0 : index
    %52 = vector.load %arg2[%c1, %c0_24, %c0_25] : memref<16x4x1xf32, #tpu.memory_space<vmem>>, vector<1x4x1xf32>
    %53 = vector.shape_cast %52 : vector<1x4x1xf32> to vector<4x1xf32>
    %54 = vector.broadcast %53 : vector<4x1xf32> to vector<4x384xf32>
    %55 = arith.mulf %9, %54 : vector<4x384xf32>
    %c9 = arith.constant 9 : index
    %c0_26 = arith.constant 0 : index
    %c0_27 = arith.constant 0 : index
    %56 = vector.load %arg2[%c9, %c0_26, %c0_27] : memref<16x4x1xf32, #tpu.memory_space<vmem>>, vector<1x4x1xf32>
    %57 = vector.shape_cast %56 : vector<1x4x1xf32> to vector<4x1xf32>
    %58 = vector.broadcast %57 : vector<4x1xf32> to vector<4x384xf32>
    %59 = arith.mulf %5, %58 : vector<4x384xf32>
    %60 = arith.addf %55, %59 : vector<4x384xf32>
    %c3 = arith.constant 3 : index
    %c0_28 = arith.constant 0 : index
    %c0_29 = arith.constant 0 : index
    %61 = vector.load %arg2[%c3, %c0_28, %c0_29] : memref<16x4x1xf32, #tpu.memory_space<vmem>>, vector<1x4x1xf32>
    %62 = vector.shape_cast %61 : vector<1x4x1xf32> to vector<4x1xf32>
    %63 = vector.broadcast %62 : vector<4x1xf32> to vector<4x384xf32>
    %64 = arith.mulf %12, %63 : vector<4x384xf32>
    %65 = arith.addf %60, %64 : vector<4x384xf32>
    %c11 = arith.constant 11 : index
    %c0_30 = arith.constant 0 : index
    %c0_31 = arith.constant 0 : index
    %66 = vector.load %arg2[%c11, %c0_30, %c0_31] : memref<16x4x1xf32, #tpu.memory_space<vmem>>, vector<1x4x1xf32>
    %67 = vector.shape_cast %66 : vector<1x4x1xf32> to vector<4x1xf32>
    %68 = vector.broadcast %67 : vector<4x1xf32> to vector<4x384xf32>
    %69 = arith.mulf %7, %68 : vector<4x384xf32>
    %70 = arith.addf %65, %69 : vector<4x384xf32>
    %c0_32 = arith.constant 0 : index
    %c0_33 = arith.constant 0 : index
    %c0_34 = arith.constant 0 : index
    %71 = vector.load %arg2[%c0_32, %c0_33, %c0_34] : memref<16x4x1xf32, #tpu.memory_space<vmem>>, vector<1x4x1xf32>
    %72 = vector.shape_cast %71 : vector<1x4x1xf32> to vector<4x1xf32>
    %73 = vector.broadcast %72 : vector<4x1xf32> to vector<4x384xf32>
    %74 = arith.mulf %13, %73 : vector<4x384xf32>
    %c8 = arith.constant 8 : index
    %c0_35 = arith.constant 0 : index
    %c0_36 = arith.constant 0 : index
    %75 = vector.load %arg2[%c8, %c0_35, %c0_36] : memref<16x4x1xf32, #tpu.memory_space<vmem>>, vector<1x4x1xf32>
    %76 = vector.shape_cast %75 : vector<1x4x1xf32> to vector<4x1xf32>
    %77 = vector.broadcast %76 : vector<4x1xf32> to vector<4x384xf32>
    %78 = arith.mulf %8, %77 : vector<4x384xf32>
    %79 = arith.addf %74, %78 : vector<4x384xf32>
    %c2 = arith.constant 2 : index
    %c0_37 = arith.constant 0 : index
    %c0_38 = arith.constant 0 : index
    %80 = vector.load %arg2[%c2, %c0_37, %c0_38] : memref<16x4x1xf32, #tpu.memory_space<vmem>>, vector<1x4x1xf32>
    %81 = vector.shape_cast %80 : vector<1x4x1xf32> to vector<4x1xf32>
    %82 = vector.broadcast %81 : vector<4x1xf32> to vector<4x384xf32>
    %83 = arith.mulf %9, %82 : vector<4x384xf32>
    %84 = arith.addf %79, %83 : vector<4x384xf32>
    %c10 = arith.constant 10 : index
    %c0_39 = arith.constant 0 : index
    %c0_40 = arith.constant 0 : index
    %85 = vector.load %arg2[%c10, %c0_39, %c0_40] : memref<16x4x1xf32, #tpu.memory_space<vmem>>, vector<1x4x1xf32>
    %86 = vector.shape_cast %85 : vector<1x4x1xf32> to vector<4x1xf32>
    %87 = vector.broadcast %86 : vector<4x1xf32> to vector<4x384xf32>
    %88 = arith.mulf %5, %87 : vector<4x384xf32>
    %89 = arith.addf %84, %88 : vector<4x384xf32>
    %90 = tpu.concatenate %32, %51, %70, %89 in 1 : vector<4x384xf32>, vector<4x384xf32>, vector<4x384xf32>, vector<4x384xf32> -> vector<4x1536xf32>
    %91 = vector.broadcast %2 : vector<4x1xf32> to vector<4x1536xf32>
    %92 = arith.addf %90, %91 : vector<4x1536xf32>
    %cst = arith.constant 0.000000e+00 : f32
    %cst_41 = arith.constant 6.000000e+00 : f32
    %93 = vector.broadcast %cst : f32 to vector<4x1536xf32>
    %94 = arith.maximumf %93, %92 : vector<4x1536xf32>
    %95 = vector.broadcast %cst_41 : f32 to vector<4x1536xf32>
    %96 = arith.minimumf %95, %94 : vector<4x1536xf32>
    %97 = arith.truncf %96 : vector<4x1536xf32> to vector<4x1536xbf16>
    %cst_42 = arith.constant dense<0.000000e+00> : vector<8x1536xf32>
    %98 = tpu.matmul %3, %97, %cst_42 {dimension_numbers = #tpu.dot_dimension_numbers<[1], [0], [0], [1], [0, 0, 1, 1], [], []>} : vector<8x4xbf16>, vector<4x1536xbf16>, vector<8x1536xf32> -> vector<8x1536xf32>
    %99 = vector.broadcast %4 : vector<8x1xf32> to vector<8x1536xf32>
    %100 = arith.addf %98, %99 : vector<8x1536xf32>
    %cst_43 = arith.constant 0.000000e+00 : f32
    %cst_44 = arith.constant 6.000000e+00 : f32
    %101 = vector.broadcast %cst_43 : f32 to vector<8x1536xf32>
    %102 = arith.maximumf %101, %100 : vector<8x1536xf32>
    %103 = vector.broadcast %cst_44 : f32 to vector<8x1536xf32>
    %104 = arith.minimumf %103, %102 : vector<8x1536xf32>
    %c0_45 = arith.constant 0 : index
    %c0_46 = arith.constant 0 : index
    %c0_47 = arith.constant 0 : index
    %105 = vector.load %arg6[%c0_45, %c0_46, %c0_47] : memref<1x8x1536xf32, #tpu.memory_space<vmem>>, vector<1x8x1536xf32>
    %106 = vector.shape_cast %105 : vector<1x8x1536xf32> to vector<8x1536xf32>
    %107 = vector.shape_cast %104 : vector<8x1536xf32> to vector<1x8x1536xf32>
    tpu.vector_store %arg6[%c0_45, %c0_46, %c0_47], %107 {strides = array<i32>} : memref<1x8x1536xf32, #tpu.memory_space<vmem>>, vector<1x8x1536xf32>,
    return
  }
  func.func @transform_0(%arg0: i32) -> (i32, i32, i32) {
    %c0_i32 = arith.constant 0 : i32
    %c0_i32_0 = arith.constant 0 : i32
    %c0_i32_1 = arith.constant 0 : i32
    return %arg0, %c0_i32, %c0_i32_0 : i32, i32, i32
  }
  func.func @transform_1(%arg0: i32) -> (i32, i32, i32) {
    %c0_i32 = arith.constant 0 : i32
    %c0_i32_0 = arith.constant 0 : i32
    %c0_i32_1 = arith.constant 0 : i32
    %c0_i32_2 = arith.constant 0 : i32
    return %c0_i32, %c0_i32_0, %c0_i32_1 : i32, i32, i32
  }
  func.func @transform_2(%arg0: i32) -> (i32, i32) {
    %c0_i32 = arith.constant 0 : i32
    %c0_i32_0 = arith.constant 0 : i32
    %c0_i32_1 = arith.constant 0 : i32
    return %c0_i32, %c0_i32_0 : i32, i32
  }
  func.func @transform_3(%arg0: i32) -> (i32, i32) {
    %c0_i32 = arith.constant 0 : i32
    %c0_i32_0 = arith.constant 0 : i32
    %c0_i32_1 = arith.constant 0 : i32
    return %c0_i32, %c0_i32_0 : i32, i32
  }
  func.func @transform_4(%arg0: i32) -> (i32, i32) {
    %c0_i32 = arith.constant 0 : i32
    %c0_i32_0 = arith.constant 0 : i32
    %c0_i32_1 = arith.constant 0 : i32
    return %c0_i32, %c0_i32_0 : i32, i32
  }
  func.func @transform_5(%arg0: i32) -> (i32, i32, i32) {
    %c0_i32 = arith.constant 0 : i32
    %c0_i32_0 = arith.constant 0 : i32
    %c0_i32_1 = arith.constant 0 : i32
    return %arg0, %c0_i32, %c0_i32_0 : i32, i32, i32
  }
}

</mosaic_0001>

<llo_original>
// kernel: deconv_block.1
$region0: #{deconv_block.1}
  #allocation0 [shape = 'u32[]', space=smem, size = 0x4, offset = 0x4, fixed_abs, tag = 'smem constant byte address 0x4 - core index']
  #allocation1 [shape = 'u32[144,128]{1,0:T(1,128)}', space=vmem, size = 0x12000, scoped, tag = 'internal scratch']
  %s0 = inlined_call_operand.vmem [shape: f32[2,4,422], index: 0, kind: input, shape index: {}]
  %s1 = inlined_call_operand.vmem [shape: f32[16,4,1], index: 1, kind: input, shape index: {}]
  %s2 = inlined_call_operand.vmem [shape: f32[4,1], index: 2, kind: input, shape index: {}]
  %s3 = inlined_call_operand.vmem [shape: bf16[8,4], index: 3, kind: input, shape index: {}]
  %s4 = inlined_call_operand.vmem [shape: f32[8,1], index: 4, kind: input, shape index: {}]
  %s5 = inlined_call_operand.vmem [shape: f32[2,8,1536], index: 5, kind: output, shape index: {}]
  %s6 = sld [smem:[#allocation0]]
  $region53: #{deconv_block.1} parent=0
    _
  %s8 = ssub.s32 1, %s6
  %s9 = scalar_select 0, %s8, %s6
  loop: start=0, step=1, limit=4
  $region2: #{deconv_block.1} parent=0 // loop_pre_header
    _
  $region3: #{deconv_block.1} parent=0 // loop_header
    %s11 = sphi 0, %s15
    %p12 = scmp.ge.s32.totalorder %s11, 4
    %s21 = sphi 0, %s23
    %s24 = sphi 0, %s21
    %s25 = sphi 0, %s24
    %s41 = sphi 0, %s25
    %s45 = sphi 0, %s45
    %s47 = sphi 0, %s45
    %s48 = sphi 0, %s47
    %s62 = sphi 0, %s48
    %s66 = sphi 0, %s66
    %s68 = sphi 0, %s66
    %s69 = sphi 0, %s68
    %s83 = sphi 0, %s69
    %s87 = sphi 0, %s87
    %s89 = sphi 0, %s87
    %s90 = sphi 0, %s89
    %s104 = sphi 0, %s90
    %s108 = sphi 0, %s108
    %s110 = sphi 0, %s108
    %s111 = sphi 0, %s110
    %s125 = sphi 0, %s111
    %s131 = sphi 0, %s133
    %s134 = sphi 0, %s131
    %s135 = sphi 0, %s134
    %s151 = sphi 0, %s135
  $region4: #{deconv_block.1} parent=0 // loop_header_branch
    %14 = sbr.rel (%p12) target = $region8
  $region5: #{deconv_block.1} parent=0 // loop_body
    %s16 = ssub.s32 %s11, 1
    %s17 = ssub.s32 %s11, 2
    %s18 = sadd.s32 %s11, 1
    %s19 = ssub.s32 %s11, %s18
    %p20 = scmp.eq.s32.totalorder %s19, 0
    %s22 = sadd.s32 %s21, 1
    %s23 = scalar_select %p20, %s21, %s22
    %p26 = pneg %p20
    %p27 = scmp.eq.s32.totalorder %s11, 1
    %p28 = por %p26, %p27
    %p29 = scmp.ne.s32.totalorder %s21, %s24
    %p30 = scmp.eq.s32.totalorder %s11, 0
    %p31 = por %p29, %p30
    %p32 = scmp.ne.s32.totalorder %s21, %s24
    %p33 = scmp.eq.s32.totalorder %s16, 1
    %p34 = por %p32, %p33
    %p35 = scmp.ne.s32.totalorder %s24, %s25
    %p36 = scmp.eq.s32.totalorder %s16, 0
    %p37 = por %p35, %p36
    %p38 = scmp.ne.s32.totalorder %s24, %s25
    %p39 = scmp.eq.s32.totalorder %s17, 1
    %p40 = por %p38, %p39
    %p42 = scmp.ne.s32.totalorder %s25, %s41
    %p43 = scmp.eq.s32.totalorder %s17, 0
    %p44 = por %p42, %p43
    %s46 = sadd.s32 %s45, 1
    %p49 = scmp.eq.s32.totalorder %s11, 1
    %p50 = scmp.ne.s32.totalorder %s45, %s47
    %p51 = scmp.eq.s32.totalorder %s11, 0
    %p52 = por %p50, %p51
    %p53 = scmp.ne.s32.totalorder %s45, %s47
    %p54 = scmp.eq.s32.totalorder %s16, 1
    %p55 = por %p53, %p54
    %p56 = scmp.ne.s32.totalorder %s47, %s48
    %p57 = scmp.eq.s32.totalorder %s16, 0
    %p58 = por %p56, %p57
    %p59 = scmp.ne.s32.totalorder %s47, %s48
    %p60 = scmp.eq.s32.totalorder %s17, 1
    %p61 = por %p59, %p60
    %p63 = scmp.ne.s32.totalorder %s48, %s62
    %p64 = scmp.eq.s32.totalorder %s17, 0
    %p65 = por %p63, %p64
    %s67 = sadd.s32 %s66, 1
    %p70 = scmp.eq.s32.totalorder %s11, 1
    %p71 = scmp.ne.s32.totalorder %s66, %s68
    %p72 = scmp.eq.s32.totalorder %s11, 0
    %p73 = por %p71, %p72
    %p74 = scmp.ne.s32.totalorder %s66, %s68
    %p75 = scmp.eq.s32.totalorder %s16, 1
    %p76 = por %p74, %p75
    %p77 = scmp.ne.s32.totalorder %s68, %s69
    %p78 = scmp.eq.s32.totalorder %s16, 0
    %p79 = por %p77, %p78
    %p80 = scmp.ne.s32.totalorder %s68, %s69
    %p81 = scmp.eq.s32.totalorder %s17, 1
    %p82 = por %p80, %p81
    %p84 = scmp.ne.s32.totalorder %s69, %s83
    %p85 = scmp.eq.s32.totalorder %s17, 0
    %p86 = por %p84, %p85
    %s88 = sadd.s32 %s87, 1
    %p91 = scmp.eq.s32.totalorder %s11, 1
    %p92 = scmp.ne.s32.totalorder %s87, %s89
    %p93 = scmp.eq.s32.totalorder %s11, 0
    %p94 = por %p92, %p93
    %p95 = scmp.ne.s32.totalorder %s87, %s89
    %p96 = scmp.eq.s32.totalorder %s16, 1
    %p97 = por %p95, %p96
    %p98 = scmp.ne.s32.totalorder %s89, %s90
    %p99 = scmp.eq.s32.totalorder %s16, 0
    %p100 = por %p98, %p99
    %p101 = scmp.ne.s32.totalorder %s89, %s90
    %p102 = scmp.eq.s32.totalorder %s17, 1
    %p103 = por %p101, %p102
    %p105 = scmp.ne.s32.totalorder %s90, %s104
    %p106 = scmp.eq.s32.totalorder %s17, 0
    %p107 = por %p105, %p106
    %s109 = sadd.s32 %s108, 1
    %p112 = scmp.eq.s32.totalorder %s11, 1
    %p113 = scmp.ne.s32.totalorder %s108, %s110
    %p114 = scmp.eq.s32.totalorder %s11, 0
    %p115 = por %p113, %p114
    %p116 = scmp.ne.s32.totalorder %s108, %s110
    %p117 = scmp.eq.s32.totalorder %s16, 1
    %p118 = por %p116, %p117
    %p119 = scmp.ne.s32.totalorder %s110, %s111
    %p120 = scmp.eq.s32.totalorder %s16, 0
    %p121 = por %p119, %p120
    %p122 = scmp.ne.s32.totalorder %s110, %s111
    %p123 = scmp.eq.s32.totalorder %s17, 1
    %p124 = por %p122, %p123
    %p126 = scmp.ne.s32.totalorder %s111, %s125
    %p127 = scmp.eq.s32.totalorder %s17, 0
    %p128 = por %p126, %p127
    %s129 = ssub.s32 %s11, %s18
    %p130 = scmp.eq.s32.totalorder %s129, 0
    %s132 = sadd.s32 %s131, 1
    %s133 = scalar_select %p130, %s131, %s132
    %p136 = pneg %p130
    %p137 = scmp.eq.s32.totalorder %s11, 1
    %p138 = por %p136, %p137
    %p139 = scmp.ne.s32.totalorder %s131, %s134
    %p140 = scmp.eq.s32.totalorder %s11, 0
    %p141 = por %p139, %p140
    %p142 = scmp.ne.s32.totalorder %s131, %s134
    %p143 = scmp.eq.s32.totalorder %s16, 1
    %p144 = por %p142, %p143
    %p145 = scmp.ne.s32.totalorder %s134, %s135
    %p146 = scmp.eq.s32.totalorder %s16, 0
    %p147 = por %p145, %p146
    %p148 = scmp.ne.s32.totalorder %s134, %s135
    %p149 = scmp.eq.s32.totalorder %s17, 1
    %p150 = por %p148, %p149
    %p152 = scmp.ne.s32.totalorder %s135, %s151
    %p153 = scmp.eq.s32.totalorder %s17, 0
    %p154 = por %p152, %p153
    %p155 = scmp.le.s32.totalorder 1, %s11
    %p156 = scmp.lt.s32.totalorder %s11, 3
    %p157 = pnand %p155, %p156
    %p158 = pneg %p157
    // Predicated region
    $region9: #{deconv_block.1} parent=5 // pred_check
      _
    $region10: #{deconv_block.1} parent=5 // pred_check_branch
      %160 = sbr.rel (%p157) target = $region12
    $region11: #{deconv_block.1} parent=5 // pred_region
      %s161 = ssub.s32 %s11, 1
      // Predicated region
      $region13: #{deconv_block.1} parent=11 // pred_check
        %p162 = pneg %p58
      $region14: #{deconv_block.1} parent=11 // pred_check_branch
        %164 = sbr.rel (%p162) target = $region16
      $region15: #{deconv_block.1} parent=11 // pred_region
        _
      $region16: #{deconv_block.1} parent=11 // pred_fallthru
        _
      // Predicated region
      $region17: #{deconv_block.1} parent=11 // pred_check
        %p165 = pneg %p79
      $region18: #{deconv_block.1} parent=11 // pred_check_branch
        %167 = sbr.rel (%p165) target = $region20
      $region19: #{deconv_block.1} parent=11 // pred_region
        _
      $region20: #{deconv_block.1} parent=11 // pred_fallthru
        _
      // Predicated region
      $region21: #{deconv_block.1} parent=11 // pred_check
        %p168 = pneg %p100
      $region22: #{deconv_block.1} parent=11 // pred_check_branch
        %170 = sbr.rel (%p168) target = $region24
      $region23: #{deconv_block.1} parent=11 // pred_region
        _
      $region24: #{deconv_block.1} parent=11 // pred_fallthru
        _
      // Predicated region
      $region25: #{deconv_block.1} parent=11 // pred_check
        %p171 = pneg %p121
      $region26: #{deconv_block.1} parent=11 // pred_check_branch
        %173 = sbr.rel (%p171) target = $region28
      $region27: #{deconv_block.1} parent=11 // pred_region
        _
      $region28: #{deconv_block.1} parent=11 // pred_fallthru
        _
    $region12: #{deconv_block.1} parent=5 // pred_fallthru
      _
    %p174 = scmp.lt.s32.totalorder %s11, 2
    // Predicated region
    $region29: #{deconv_block.1} parent=5 // pred_check
      %p175 = pneg %p174
    $region30: #{deconv_block.1} parent=5 // pred_check_branch
      %177 = sbr.rel (%p175) target = $region32
    $region31: #{deconv_block.1} parent=5 // pred_region
      // Predicated region
      $region33: #{deconv_block.1} parent=31 // pred_check
        %p178 = pneg %p31
      $region34: #{deconv_block.1} parent=31 // pred_check_branch
        %180 = sbr.rel (%p178) target = $region36
      $region35: #{deconv_block.1} parent=31 // pred_region
        %p181 = scmp.lt.s32.totalorder %s11, 1
        %s182 = scalar_select %p181, %s11, 1
        %s183 = smul.addr %s182, 4
        %s184 = smul.addr %s183, 4
        %s185 = scalar_lea.vmem %s0, %s184
      $region36: #{deconv_block.1} parent=31 // pred_fallthru
        _
    $region32: #{deconv_block.1} parent=5 // pred_fallthru
      _
    %p186 = scmp.le.s32.totalorder 1, %s11
    %p187 = scmp.lt.s32.totalorder %s11, 3
    %p188 = pnand %p186, %p187
    %p189 = pneg %p188
    // Predicated region
    $region37: #{deconv_block.1} parent=5 // pred_check
      _
    $region38: #{deconv_block.1} parent=5 // pred_check_branch
      %191 = sbr.rel (%p188) target = $region40
    $region39: #{deconv_block.1} parent=5 // pred_region
      %s192 = ssub.s32 %s11, 1
      %p193 = scmp.lt.s32.totalorder %s16, 1
      %s194 = scalar_select %p193, %s16, 1
      %s195 = smul.addr %s194, 4
      %s196 = smul.addr %s195, 4
      %s197 = scalar_lea.vmem %s0, %s196
      %p198 = pneg %p37
      %p199 = pneg %p34
      %p200 = pneg %p58
      %p201 = pneg %p55
      %p202 = pneg %p79
      %p203 = pneg %p76
      %p204 = pneg %p100
      %p205 = pneg %p97
      %p206 = pneg %p121
      %p207 = pneg %p118
      %p208 = pneg %p147
      %p209 = pneg %p144
      %p210 = scmp.lt.s32.totalorder %s16, 1
      %s211 = scalar_select %p210, %s16, 1
      %s212 = smul.addr %s211, 12
      %s213 = smul.addr %s212, 8
      %s214 = scalar_lea.vmem %s5, %s213
      %p215 = scmp.lt.s32.totalorder %s16, 1
      %s216 = scalar_select %p215, %s16, 1
      %s217 = smul.addr %s216, 4
      %s218 = smul.addr %s217, 4
      %s219 = scalar_lea.vmem %s0, %s218
      %p220 = scmp.lt.s32.totalorder %s16, 1
      %s221 = scalar_select %p220, %s16, 1
      %s222 = smul.addr %s221, 12
      %s223 = smul.addr %s222, 8
      %s224 = scalar_lea.vmem %s5, %s223
      %v226 = vld [vmem:[%s219] sm:$0xff]
      %v227 = vld [vmem:[%s219 + $0x8] sm:$0xff]
      %v228 = vld [vmem:[%s2] sm:$0xf]
      %v229 = vld [vmem:[%s3] sm:$0xf]
      %v230 = vld [vmem:[%s4] sm:$0xff]
      %s231 = scalar_lea.vmem %s1, 20
      %v232 = vld [vmem:[%s231] sm:$0xf]
      %234 = vset.pattern.permute.xlu0 0
      %235 = vperm.xlu0 %234, %v232
      %v236 = vpop.permute.xlu0 %235
      %v238 = vunpack.c.l.s4 839922192
      %v239 = vunpack.c.0.s8 %v238
      %v240 = vlaneseq
      %v241 = vshrl.u32 %v240, 7
      %v242 = vsub.s32 %v239, %v241
      %v243 = vrot.slane %v236, %v242
      %v245 = vmul.f32 %v226, %v243
      %v246 = vmul.f32 %v227, %v243
      %s247 = scalar_lea.vmem %s1, 52
      %v248 = vld [vmem:[%s247] sm:$0xf]
      %250 = vset.pattern.permute.xlu0 0
      %251 = vperm.xlu0 %250, %v248
      %v252 = vpop.permute.xlu0 %251
      %v254 = vunpack.c.l.s4 839922192
      %v255 = vunpack.c.0.s8 %v254
      %v256 = vlaneseq
      %v257 = vshrl.u32 %v256, 7
      %v258 = vsub.s32 %v255, %v257
      %v259 = vrot.slane %v252, %v258
      %v261 = vmul.f32 %v226, %v259
      %v262 = vmul.f32 %v227, %v259
      %265 = vrot.lane.b32.xlu0 %v261, 18
      %v266 = vpop.permute.xlu0 %265
      %267 = vrot.lane.b32.xlu0 %v262, 18
      %v268 = vpop.permute.xlu0 %267
      %v269 = vrot.slane %v266, 4
      %v270 = vrot.slane %v268, 4
      %vm271 = vcmask 146432
      %v272 = vsel %vm271, %v269, %v266
      %vm273 = vcmask 1043456
      %v274 = vsel %vm273, %v269, %v270
      %v275 = vsel %vm271, %v274, %v268
      %v278 = vadd.f32 %v245, %v272
      %v279 = vadd.f32 %v246, %v275
      %s280 = scalar_lea.vmem %s1, 28
      %v281 = vld [vmem:[%s280] sm:$0xf]
      %283 = vset.pattern.permute.xlu0 0
      %284 = vperm.xlu0 %283, %v281
      %v285 = vpop.permute.xlu0 %284
      %v287 = vunpack.c.l.s4 839922192
      %v288 = vunpack.c.0.s8 %v287
      %v289 = vlaneseq
      %v290 = vshrl.u32 %v289, 7
      %v291 = vsub.s32 %v288, %v290
      %v292 = vrot.slane %v285, %v291
      %v294 = vmul.f32 %v226, %v292
      %v295 = vmul.f32 %v227, %v292
      %298 = vrot.lane.b32.xlu0 %v294, 1
      %v299 = vpop.permute.xlu0 %298
      %300 = vrot.lane.b32.xlu0 %v295, 1
      %v301 = vpop.permute.xlu0 %300
      %v302 = vrot.slane %v299, 4
      %v303 = vrot.slane %v301, 4
      %vm304 = vcmask 7168
      %v305 = vsel %vm304, %v302, %v299
      %v306 = vsel %vm273, %v302, %v303
      %v307 = vsel %vm304, %v306, %v301
      %v310 = vadd.f32 %v278, %v305
      %v311 = vadd.f32 %v279, %v307
      %s312 = scalar_lea.vmem %s1, 60
      %v313 = vld [vmem:[%s312] sm:$0xf]
      %315 = vset.pattern.permute.xlu0 0
      %316 = vperm.xlu0 %315, %v313
      %v317 = vpop.permute.xlu0 %316
      %v319 = vunpack.c.l.s4 839922192
      %v320 = vunpack.c.0.s8 %v319
      %v321 = vlaneseq
      %v322 = vshrl.u32 %v321, 7
      %v323 = vsub.s32 %v320, %v322
      %v324 = vrot.slane %v317, %v323
      %v326 = vmul.f32 %v226, %v324
      %v327 = vmul.f32 %v227, %v324
      %330 = vrot.lane.b32.xlu0 %v326, 19
      %v331 = vpop.permute.xlu0 %330
      %332 = vrot.lane.b32.xlu0 %v327, 19
      %v333 = vpop.permute.xlu0 %332
      %v334 = vrot.slane %v331, 4
      %v335 = vrot.slane %v333, 4
      %vm336 = vcmask 154624
      %v337 = vsel %vm336, %v334, %v331
      %v338 = vsel %vm273, %v334, %v335
      %v339 = vsel %vm336, %v338, %v333
      %v342 = vadd.f32 %v310, %v337
      %v343 = vadd.f32 %v311, %v339
      %s344 = scalar_lea.vmem %s1, 16
      %v345 = vld [vmem:[%s344] sm:$0xf]
      %347 = vset.pattern.permute.xlu0 0
      %348 = vperm.xlu0 %347, %v345
      %v349 = vpop.permute.xlu0 %348
      %v351 = vunpack.c.l.s4 839922192
      %v352 = vunpack.c.0.s8 %v351
      %v353 = vlaneseq
      %v354 = vshrl.u32 %v353, 7
      %v355 = vsub.s32 %v352, %v354
      %v356 = vrot.slane %v349, %v355
      %v358 = vmul.f32 %v226, %v356
      %v359 = vmul.f32 %v227, %v356
      %s360 = scalar_lea.vmem %s1, 48
      %v361 = vld [vmem:[%s360] sm:$0xf]
      %363 = vset.pattern.permute.xlu0 0
      %364 = vperm.xlu0 %363, %v361
      %v365 = vpop.permute.xlu0 %364
      %v367 = vunpack.c.l.s4 839922192
      %v368 = vunpack.c.0.s8 %v367
      %v369 = vlaneseq
      %v370 = vshrl.u32 %v369, 7
      %v371 = vsub.s32 %v368, %v370
      %v372 = vrot.slane %v365, %v371
      %v374 = vmul.f32 %v226, %v372
      %v375 = vmul.f32 %v227, %v372
      %378 = vrot.lane.b32.xlu0 %v374, 18
      %v379 = vpop.permute.xlu0 %378
      %380 = vrot.lane.b32.xlu0 %v375, 18
      %v381 = vpop.permute.xlu0 %380
      %v382 = vrot.slane %v379, 4
      %v383 = vrot.slane %v381, 4
      %v384 = vsel %vm271, %v382, %v379
      %v385 = vsel %vm273, %v382, %v383
      %v386 = vsel %vm271, %v385, %v381
      %v389 = vadd.f32 %v358, %v384
      %v390 = vadd.f32 %v359, %v386
      %s391 = scalar_lea.vmem %s1, 24
      %v392 = vld [vmem:[%s391] sm:$0xf]
      %394 = vset.pattern.permute.xlu0 0
      %395 = vperm.xlu0 %394, %v392
      %v396 = vpop.permute.xlu0 %395
      %v398 = vunpack.c.l.s4 839922192
      %v399 = vunpack.c.0.s8 %v398
      %v400 = vlaneseq
      %v401 = vshrl.u32 %v400, 7
      %v402 = vsub.s32 %v399, %v401
      %v403 = vrot.slane %v396, %v402
      %v405 = vmul.f32 %v226, %v403
      %v406 = vmul.f32 %v227, %v403
      %409 = vrot.lane.b32.xlu0 %v405, 1
      %v410 = vpop.permute.xlu0 %409
      %411 = vrot.lane.b32.xlu0 %v406, 1
      %v412 = vpop.permute.xlu0 %411
      %v413 = vrot.slane %v410, 4
      %v414 = vrot.slane %v412, 4
      %v415 = vsel %vm304, %v413, %v410
      %v416 = vsel %vm273, %v413, %v414
      %v417 = vsel %vm304, %v416, %v412
      %v420 = vadd.f32 %v389, %v415
      %v421 = vadd.f32 %v390, %v417
      %s422 = scalar_lea.vmem %s1, 56
      %v423 = vld [vmem:[%s422] sm:$0xf]
      %425 = vset.pattern.permute.xlu0 0
      %426 = vperm.xlu0 %425, %v423
      %v427 = vpop.permute.xlu0 %426
      %v429 = vunpack.c.l.s4 839922192
      %v430 = vunpack.c.0.s8 %v429
      %v431 = vlaneseq
      %v432 = vshrl.u32 %v431, 7
      %v433 = vsub.s32 %v430, %v432
      %v434 = vrot.slane %v427, %v433
      %v436 = vmul.f32 %v226, %v434
      %v437 = vmul.f32 %v227, %v434
      %440 = vrot.lane.b32.xlu0 %v436, 19
      %v441 = vpop.permute.xlu0 %440
      %442 = vrot.lane.b32.xlu0 %v437, 19
      %v443 = vpop.permute.xlu0 %442
      %v444 = vrot.slane %v441, 4
      %v445 = vrot.slane %v443, 4
      %v446 = vsel %vm336, %v444, %v441
      %v447 = vsel %vm273, %v444, %v445
      %v448 = vsel %vm336, %v447, %v443
      %v451 = vadd.f32 %v420, %v446
      %v452 = vadd.f32 %v421, %v448
      %s453 = scalar_lea.vmem %s1, 4
      %v454 = vld [vmem:[%s453] sm:$0xf]
      %456 = vset.pattern.permute.xlu0 0
      %457 = vperm.xlu0 %456, %v454
      %v458 = vpop.permute.xlu0 %457
      %v460 = vunpack.c.l.s4 839922192
      %v461 = vunpack.c.0.s8 %v460
      %v462 = vlaneseq
      %v463 = vshrl.u32 %v462, 7
      %v464 = vsub.s32 %v461, %v463
      %v465 = vrot.slane %v458, %v464
      %v467 = vmul.f32 %v226, %v465
      %v468 = vmul.f32 %v227, %v465
      %s469 = scalar_lea.vmem %s1, 36
      %v470 = vld [vmem:[%s469] sm:$0xf]
      %472 = vset.pattern.permute.xlu0 0
      %473 = vperm.xlu0 %472, %v470
      %v474 = vpop.permute.xlu0 %473
      %v476 = vunpack.c.l.s4 839922192
      %v477 = vunpack.c.0.s8 %v476
      %v478 = vlaneseq
      %v479 = vshrl.u32 %v478, 7
      %v480 = vsub.s32 %v477, %v479
      %v481 = vrot.slane %v474, %v480
      %v483 = vmul.f32 %v226, %v481
      %v484 = vmul.f32 %v227, %v481
      %487 = vrot.lane.b32.xlu0 %v483, 18
      %v488 = vpop.permute.xlu0 %487
      %489 = vrot.lane.b32.xlu0 %v484, 18
      %v490 = vpop.permute.xlu0 %489
      %v491 = vrot.slane %v488, 4
      %v492 = vrot.slane %v490, 4
      %v493 = vsel %vm271, %v491, %v488
      %v494 = vsel %vm273, %v491, %v492
      %v495 = vsel %vm271, %v494, %v490
      %v498 = vadd.f32 %v467, %v493
      %v499 = vadd.f32 %v468, %v495
      %s500 = scalar_lea.vmem %s1, 12
      %v501 = vld [vmem:[%s500] sm:$0xf]
      %503 = vset.pattern.permute.xlu0 0
      %504 = vperm.xlu0 %503, %v501
      %v505 = vpop.permute.xlu0 %504
      %v507 = vunpack.c.l.s4 839922192
      %v508 = vunpack.c.0.s8 %v507
      %v509 = vlaneseq
      %v510 = vshrl.u32 %v509, 7
      %v511 = vsub.s32 %v508, %v510
      %v512 = vrot.slane %v505, %v511
      %v514 = vmul.f32 %v226, %v512
      %v515 = vmul.f32 %v227, %v512
      %518 = vrot.lane.b32.xlu0 %v514, 1
      %v519 = vpop.permute.xlu0 %518
      %520 = vrot.lane.b32.xlu0 %v515, 1
      %v521 = vpop.permute.xlu0 %520
      %v522 = vrot.slane %v519, 4
      %v523 = vrot.slane %v521, 4
      %v524 = vsel %vm304, %v522, %v519
      %v525 = vsel %vm273, %v522, %v523
      %v526 = vsel %vm304, %v525, %v521
      %v529 = vadd.f32 %v498, %v524
      %v530 = vadd.f32 %v499, %v526
      %s531 = scalar_lea.vmem %s1, 44
      %v532 = vld [vmem:[%s531] sm:$0xf]
      %534 = vset.pattern.permute.xlu0 0
      %535 = vperm.xlu0 %534, %v532
      %v536 = vpop.permute.xlu0 %535
      %v538 = vunpack.c.l.s4 839922192
      %v539 = vunpack.c.0.s8 %v538
      %v540 = vlaneseq
      %v541 = vshrl.u32 %v540, 7
      %v542 = vsub.s32 %v539, %v541
      %v543 = vrot.slane %v536, %v542
      %v545 = vmul.f32 %v226, %v543
      %v546 = vmul.f32 %v227, %v543
      %549 = vrot.lane.b32.xlu0 %v545, 19
      %v550 = vpop.permute.xlu0 %549
      %551 = vrot.lane.b32.xlu0 %v546, 19
      %v552 = vpop.permute.xlu0 %551
      %v553 = vrot.slane %v550, 4
      %v554 = vrot.slane %v552, 4
      %v555 = vsel %vm336, %v553, %v550
      %v556 = vsel %vm273, %v553, %v554
      %v557 = vsel %vm336, %v556, %v552
      %v560 = vadd.f32 %v529, %v555
      %v561 = vadd.f32 %v530, %v557
      %v562 = vld [vmem:[%s1] sm:$0xf]
      %564 = vset.pattern.permute.xlu0 0
      %565 = vperm.xlu0 %564, %v562
      %v566 = vpop.permute.xlu0 %565
      %v568 = vunpack.c.l.s4 839922192
      %v569 = vunpack.c.0.s8 %v568
      %v570 = vlaneseq
      %v571 = vshrl.u32 %v570, 7
      %v572 = vsub.s32 %v569, %v571
      %v573 = vrot.slane %v566, %v572
      %v575 = vmul.f32 %v226, %v573
      %v576 = vmul.f32 %v227, %v573
      %s577 = scalar_lea.vmem %s1, 32
      %v578 = vld [vmem:[%s577] sm:$0xf]
      %580 = vset.pattern.permute.xlu0 0
      %581 = vperm.xlu0 %580, %v578
      %v582 = vpop.permute.xlu0 %581
      %v584 = vunpack.c.l.s4 839922192
      %v585 = vunpack.c.0.s8 %v584
      %v586 = vlaneseq
      %v587 = vshrl.u32 %v586, 7
      %v588 = vsub.s32 %v585, %v587
      %v589 = vrot.slane %v582, %v588
      %v591 = vmul.f32 %v226, %v589
      %v592 = vmul.f32 %v227, %v589
      %595 = vrot.lane.b32.xlu0 %v591, 18
      %v596 = vpop.permute.xlu0 %595
      %597 = vrot.lane.b32.xlu0 %v592, 18
      %v598 = vpop.permute.xlu0 %597
      %v599 = vrot.slane %v596, 4
      %v600 = vrot.slane %v598, 4
      %v601 = vsel %vm271, %v599, %v596
      %v602 = vsel %vm273, %v599, %v600
      %v603 = vsel %vm271, %v602, %v598
      %v606 = vadd.f32 %v575, %v601
      %v607 = vadd.f32 %v576, %v603
      %s608 = scalar_lea.vmem %s1, 8
      %v609 = vld [vmem:[%s608] sm:$0xf]
      %611 = vset.pattern.permute.xlu0 0
      %612 = vperm.xlu0 %611, %v609
      %v613 = vpop.permute.xlu0 %612
      %v615 = vunpack.c.l.s4 839922192
      %v616 = vunpack.c.0.s8 %v615
      %v617 = vlaneseq
      %v618 = vshrl.u32 %v617, 7
      %v619 = vsub.s32 %v616, %v618
      %v620 = vrot.slane %v613, %v619
      %v622 = vmul.f32 %v226, %v620
      %v623 = vmul.f32 %v227, %v620
      %626 = vrot.lane.b32.xlu0 %v622, 1
      %v627 = vpop.permute.xlu0 %626
      %628 = vrot.lane.b32.xlu0 %v623, 1
      %v629 = vpop.permute.xlu0 %628
      %v630 = vrot.slane %v627, 4
      %v631 = vrot.slane %v629, 4
      %v632 = vsel %vm304, %v630, %v627
      %v633 = vsel %vm273, %v630, %v631
      %v634 = vsel %vm304, %v633, %v629
      %v637 = vadd.f32 %v606, %v632
      %v638 = vadd.f32 %v607, %v634
      %s639 = scalar_lea.vmem %s1, 40
      %v640 = vld [vmem:[%s639] sm:$0xf]
      %642 = vset.pattern.permute.xlu0 0
      %643 = vperm.xlu0 %642, %v640
      %v644 = vpop.permute.xlu0 %643
      %v646 = vunpack.c.l.s4 839922192
      %v647 = vunpack.c.0.s8 %v646
      %v648 = vlaneseq
      %v649 = vshrl.u32 %v648, 7
      %v650 = vsub.s32 %v647, %v649
      %v651 = vrot.slane %v644, %v650
      %v653 = vmul.f32 %v226, %v651
      %v654 = vmul.f32 %v227, %v651
      %657 = vrot.lane.b32.xlu0 %v653, 19
      %v658 = vpop.permute.xlu0 %657
      %659 = vrot.lane.b32.xlu0 %v654, 19
      %v660 = vpop.permute.xlu0 %659
      %v661 = vrot.slane %v658, 4
      %v662 = vrot.slane %v660, 4
      %v663 = vsel %vm336, %v661, %v658
      %v664 = vsel %vm273, %v661, %v662
      %v665 = vsel %vm336, %v664, %v660
      %v668 = vadd.f32 %v637, %v663
      %v669 = vadd.f32 %v638, %v665
      %v672 = vcombine.high %v342, %v342
      %v673 = vcombine.high %v343, %v343
      %674 = vrot.lane.b32.xlu0 %v342, 109
      %v675 = vpop.permute.xlu0 %674
      %676 = vrot.lane.b32.xlu0 %v672, 109
      %v677 = vpop.permute.xlu0 %676
      %678 = vrot.lane.b32.xlu0 %v343, 109
      %v679 = vpop.permute.xlu0 %678
      %680 = vrot.lane.b32.xlu0 %v673, 109
      %v681 = vpop.permute.xlu0 %680
      %vm682 = vcmask 891904
      %v683 = vsel %vm682, %v675, %v677
      %v684 = vsel %vm682, %v677, %v679
      %v685 = vsel %vm682, %v679, %v681
      %v691 = vcombine.high %v451, %v451
      %v692 = vcombine.high %v452, %v452
      %693 = vrot.lane.b32.xlu0 %v451, 108
      %v694 = vpop.permute.xlu0 %693
      %695 = vrot.lane.b32.xlu0 %v691, 108
      %v696 = vpop.permute.xlu0 %695
      %697 = vrot.lane.b32.xlu0 %v452, 108
      %v698 = vpop.permute.xlu0 %697
      %699 = vrot.lane.b32.xlu0 %v692, 108
      %v700 = vpop.permute.xlu0 %699
      %vm701 = vcmask 883712
      %v702 = vsel %vm701, %v694, %v696
      %v703 = vsel %vm701, %v696, %v698
      %v704 = vsel %vm701, %v698, %v700
      %v710 = vcombine.high %v560, %v560
      %v711 = vcombine.high %v561, %v561
      %712 = vrot.lane.b32.xlu0 %v560, 91
      %v713 = vpop.permute.xlu0 %712
      %714 = vrot.lane.b32.xlu0 %v710, 91
      %v715 = vpop.permute.xlu0 %714
      %716 = vrot.lane.b32.xlu0 %v561, 91
      %v717 = vpop.permute.xlu0 %716
      %718 = vrot.lane.b32.xlu0 %v711, 91
      %v719 = vpop.permute.xlu0 %718
      %vm720 = vcmask 744448
      %v721 = vsel %vm720, %v713, %v715
      %v722 = vsel %vm720, %v715, %v717
      %v723 = vsel %vm720, %v717, %v719
      %v729 = vcombine.high %v668, %v668
      %v730 = vcombine.high %v669, %v669
      %731 = vrot.lane.b32.xlu0 %v668, 90
      %v732 = vpop.permute.xlu0 %731
      %733 = vrot.lane.b32.xlu0 %v729, 90
      %v734 = vpop.permute.xlu0 %733
      %735 = vrot.lane.b32.xlu0 %v669, 90
      %v736 = vpop.permute.xlu0 %735
      %737 = vrot.lane.b32.xlu0 %v730, 90
      %v738 = vpop.permute.xlu0 %737
      %vm739 = vcmask 736256
      %v740 = vsel %vm739, %v732, %v734
      %v741 = vsel %vm739, %v734, %v736
      %v742 = vsel %vm739, %v736, %v738
      %747 = vset.pattern.permute.xlu0 0
      %748 = vperm.xlu0 %747, %v228
      %v749 = vpop.permute.xlu0 %748
      %v751 = vadd.f32 %v683, %v749
      %v752 = vadd.f32 %v684, %v749
      %v753 = vadd.f32 %v685, %v749
      %v754 = vadd.f32 %v702, %v749
      %v755 = vadd.f32 %v703, %v749
      %v756 = vadd.f32 %v704, %v749
      %v757 = vadd.f32 %v721, %v749
      %v758 = vadd.f32 %v722, %v749
      %v759 = vadd.f32 %v723, %v749
      %v760 = vadd.f32 %v740, %v749
      %v761 = vadd.f32 %v741, %v749
      %v762 = vadd.f32 %v742, %v749
      %v763 = vmax.f32 %v751, 0.0
      %v764 = vmax.f32 %v752, 0.0
      %v765 = vmax.f32 %v753, 0.0
      %v766 = vmax.f32 %v754, 0.0
      %v767 = vmax.f32 %v755, 0.0
      %v768 = vmax.f32 %v756, 0.0
      %v769 = vmax.f32 %v757, 0.0
      %v770 = vmax.f32 %v758, 0.0
      %v771 = vmax.f32 %v759, 0.0
      %v772 = vmax.f32 %v760, 0.0
      %v773 = vmax.f32 %v761, 0.0
      %v774 = vmax.f32 %v762, 0.0
      %v775 = vmin.f32 %v763, 6.0
      %v776 = vmin.f32 %v764, 6.0
      %v777 = vmin.f32 %v765, 6.0
      %v778 = vmin.f32 %v766, 6.0
      %v779 = vmin.f32 %v767, 6.0
      %v780 = vmin.f32 %v768, 6.0
      %v781 = vmin.f32 %v769, 6.0
      %v782 = vmin.f32 %v770, 6.0
      %v783 = vmin.f32 %v771, 6.0
      %v784 = vmin.f32 %v772, 6.0
      %v785 = vmin.f32 %v773, 6.0
      %v786 = vmin.f32 %v774, 6.0
      %v787 = vpack.c.bf16 %v775, %v775
      %v788 = vpack.c.bf16 %v776, %v776
      %v789 = vpack.c.bf16 %v777, %v777
      %v790 = vpack.c.bf16 %v778, %v778
      %v791 = vpack.c.bf16 %v779, %v779
      %v792 = vpack.c.bf16 %v780, %v780
      %v793 = vpack.c.bf16 %v781, %v781
      %v794 = vpack.c.bf16 %v782, %v782
      %v795 = vpack.c.bf16 %v783, %v783
      %v796 = vpack.c.bf16 %v784, %v784
      %v797 = vpack.c.bf16 %v785, %v785
      %v798 = vpack.c.bf16 %v786, %v786
      %800 = vset.pattern.permute.xlu0 0
      %801 = vperm.xlu0 %800, %v230
      %v802 = vpop.permute.xlu0 %801
      %vm804 = vcmask 31744
      %v806 = vsel %vm804, %v229, 0
      %vm808 = vcmask 1041408
      %v810 = vsel %vm808, %v787, 0
      %v813 = vsel %vm808, %v788, 0
      %v816 = vsel %vm808, %v789, 0
      %v819 = vsel %vm808, %v790, 0
      %v822 = vsel %vm808, %v791, 0
      %v825 = vsel %vm808, %v792, 0
      %v828 = vsel %vm808, %v793, 0
      %v831 = vsel %vm808, %v794, 0
      %v834 = vsel %vm808, %v795, 0
      %v837 = vsel %vm808, %v796, 0
      %v840 = vsel %vm808, %v797, 0
      %v843 = vsel %vm808, %v798, 0
      %845 = vmatprep.subr.bf16.mxu0 0
      %846 = vmatpush1.bf16.msra.mxu0 0
      %847 = vmatprep.subr.bf16.mxu0 0
      %848 = vmatpush1.bf16.msra.mxu0 0
      %849 = vmatprep.subr.bf16.mxu0 0
      %850 = vmatpush1.bf16.msra.mxu0 0
      %851 = vmatprep.subr.bf16.mxu0 0
      %852 = vmatpush1.bf16.msra.mxu0 0
      %853 = vmatprep.subr.bf16.mxu0 0
      %854 = vmatpush1.bf16.msra.mxu0 0
      %855 = vmatprep.subr.bf16.mxu0 0
      %856 = vmatpush1.bf16.msra.mxu0 0
      %857 = vmatprep.subr.bf16.mxu0 0
      %858 = vmatpush1.bf16.msra.mxu0 0
      %859 = vmatprep.subr.bf16.mxu0 %v813
      %860 = vmatpush1.bf16.msra.mxu0 %v810
      %861 = vmatprep.subr.bf16.mxu0 0
      %862 = vmatpush2.bf16.msra.mxu0 0
      %863 = vmatprep.subr.bf16.mxu0 0
      %864 = vmatpush2.bf16.msra.mxu0 0
      %865 = vmatprep.subr.bf16.mxu0 0
      %866 = vmatpush2.bf16.msra.mxu0 0
      %867 = vmatprep.subr.bf16.mxu0 0
      %868 = vmatpush2.bf16.msra.mxu0 0
      %869 = vmatprep.subr.bf16.mxu0 0
      %870 = vmatpush2.bf16.msra.mxu0 0
      %871 = vmatprep.subr.bf16.mxu0 0
      %872 = vmatpush2.bf16.msra.mxu0 0
      %873 = vmatprep.subr.bf16.mxu0 0
      %874 = vmatpush2.bf16.msra.mxu0 0
      %875 = vmatprep.subr.bf16.mxu0 0
      %876 = vmatpush2.bf16.msra.mxu0 0
      %877 = vmatprep.mubr.bf16.mxu0 0
      %878 = vmatmul.mubr.bf16.gmra.mxu0 %v806
      %v879 = vpop.f32.mrf.mxu0
      %v880 = vadd.f32 %v802, %v879
      %v881 = vpop.f32.mrf.mxu0
      %v882 = vadd.f32 %v802, %v881
      %v883 = vpop.f32.mrf.mxu0
      %v884 = vpop.f32.mrf.mxu0
      %885 = vdwg.mxu0
      %886 = vmatprep.subr.bf16.mxu0 0
      %887 = vmatpush1.bf16.msra.mxu0 0
      %888 = vmatprep.subr.bf16.mxu0 0
      %889 = vmatpush1.bf16.msra.mxu0 0
      %890 = vmatprep.subr.bf16.mxu0 0
      %891 = vmatpush1.bf16.msra.mxu0 0
      %892 = vmatprep.subr.bf16.mxu0 0
      %893 = vmatpush1.bf16.msra.mxu0 0
      %894 = vmatprep.subr.bf16.mxu0 0
      %895 = vmatpush1.bf16.msra.mxu0 0
      %896 = vmatprep.subr.bf16.mxu0 0
      %897 = vmatpush1.bf16.msra.mxu0 0
      %898 = vmatprep.subr.bf16.mxu0 0
      %899 = vmatpush1.bf16.msra.mxu0 0
      %900 = vmatprep.subr.bf16.mxu0 %v819
      %901 = vmatpush1.bf16.msra.mxu0 %v816
      %902 = vmatprep.subr.bf16.mxu0 0
      %903 = vmatpush2.bf16.msra.mxu0 0
      %904 = vmatprep.subr.bf16.mxu0 0
      %905 = vmatpush2.bf16.msra.mxu0 0
      %906 = vmatprep.subr.bf16.mxu0 0
      %907 = vmatpush2.bf16.msra.mxu0 0
      %908 = vmatprep.subr.bf16.mxu0 0
      %909 = vmatpush2.bf16.msra.mxu0 0
      %910 = vmatprep.subr.bf16.mxu0 0
      %911 = vmatpush2.bf16.msra.mxu0 0
      %912 = vmatprep.subr.bf16.mxu0 0
      %913 = vmatpush2.bf16.msra.mxu0 0
      %914 = vmatprep.subr.bf16.mxu0 0
      %915 = vmatpush2.bf16.msra.mxu0 0
      %916 = vmatprep.subr.bf16.mxu0 0
      %917 = vmatpush2.bf16.msra.mxu0 0
      %918 = vmatprep.mubr.bf16.mxu0 0
      %919 = vmatmul.mubr.bf16.gmra.mxu0 %v806
      %v920 = vpop.f32.mrf.mxu0
      %v921 = vadd.f32 %v802, %v920
      %v922 = vpop.f32.mrf.mxu0
      %v923 = vadd.f32 %v802, %v922
      %v924 = vpop.f32.mrf.mxu0
      %v925 = vpop.f32.mrf.mxu0
      %926 = vdwg.mxu0
      %927 = vmatprep.subr.bf16.mxu0 0
      %928 = vmatpush1.bf16.msra.mxu0 0
      %929 = vmatprep.subr.bf16.mxu0 0
      %930 = vmatpush1.bf16.msra.mxu0 0
      %931 = vmatprep.subr.bf16.mxu0 0
      %932 = vmatpush1.bf16.msra.mxu0 0
      %933 = vmatprep.subr.bf16.mxu0 0
      %934 = vmatpush1.bf16.msra.mxu0 0
      %935 = vmatprep.subr.bf16.mxu0 0
      %936 = vmatpush1.bf16.msra.mxu0 0
      %937 = vmatprep.subr.bf16.mxu0 0
      %938 = vmatpush1.bf16.msra.mxu0 0
      %939 = vmatprep.subr.bf16.mxu0 0
      %940 = vmatpush1.bf16.msra.mxu0 0
      %941 = vmatprep.subr.bf16.mxu0 %v825
      %942 = vmatpush1.bf16.msra.mxu0 %v822
      %943 = vmatprep.subr.bf16.mxu0 0
      %944 = vmatpush2.bf16.msra.mxu0 0
      %945 = vmatprep.subr.bf16.mxu0 0
      %946 = vmatpush2.bf16.msra.mxu0 0
      %947 = vmatprep.subr.bf16.mxu0 0
      %948 = vmatpush2.bf16.msra.mxu0 0
      %949 = vmatprep.subr.bf16.mxu0 0
      %950 = vmatpush2.bf16.msra.mxu0 0
      %951 = vmatprep.subr.bf16.mxu0 0
      %952 = vmatpush2.bf16.msra.mxu0 0
      %953 = vmatprep.subr.bf16.mxu0 0
      %954 = vmatpush2.bf16.msra.mxu0 0
      %955 = vmatprep.subr.bf16.mxu0 0
      %956 = vmatpush2.bf16.msra.mxu0 0
      %957 = vmatprep.subr.bf16.mxu0 0
      %958 = vmatpush2.bf16.msra.mxu0 0
      %959 = vmatprep.mubr.bf16.mxu0 0
      %960 = vmatmul.mubr.bf16.gmra.mxu0 %v806
      %v961 = vpop.f32.mrf.mxu0
      %v962 = vadd.f32 %v802, %v961
      %v963 = vpop.f32.mrf.mxu0
      %v964 = vadd.f32 %v802, %v963
      %v965 = vpop.f32.mrf.mxu0
      %v966 = vpop.f32.mrf.mxu0
      %967 = vdwg.mxu0
      %968 = vmatprep.subr.bf16.mxu0 0
      %969 = vmatpush1.bf16.msra.mxu0 0
      %970 = vmatprep.subr.bf16.mxu0 0
      %971 = vmatpush1.bf16.msra.mxu0 0
      %972 = vmatprep.subr.bf16.mxu0 0
      %973 = vmatpush1.bf16.msra.mxu0 0
      %974 = vmatprep.subr.bf16.mxu0 0
      %975 = vmatpush1.bf16.msra.mxu0 0
      %976 = vmatprep.subr.bf16.mxu0 0
      %977 = vmatpush1.bf16.msra.mxu0 0
      %978 = vmatprep.subr.bf16.mxu0 0
      %979 = vmatpush1.bf16.msra.mxu0 0
      %980 = vmatprep.subr.bf16.mxu0 0
      %981 = vmatpush1.bf16.msra.mxu0 0
      %982 = vmatprep.subr.bf16.mxu0 %v831
      %983 = vmatpush1.bf16.msra.mxu0 %v828
      %984 = vmatprep.subr.bf16.mxu0 0
      %985 = vmatpush2.bf16.msra.mxu0 0
      %986 = vmatprep.subr.bf16.mxu0 0
      %987 = vmatpush2.bf16.msra.mxu0 0
      %988 = vmatprep.subr.bf16.mxu0 0
      %989 = vmatpush2.bf16.msra.mxu0 0
      %990 = vmatprep.subr.bf16.mxu0 0
      %991 = vmatpush2.bf16.msra.mxu0 0
      %992 = vmatprep.subr.bf16.mxu0 0
      %993 = vmatpush2.bf16.msra.mxu0 0
      %994 = vmatprep.subr.bf16.mxu0 0
      %995 = vmatpush2.bf16.msra.mxu0 0
      %996 = vmatprep.subr.bf16.mxu0 0
      %997 = vmatpush2.bf16.msra.mxu0 0
      %998 = vmatprep.subr.bf16.mxu0 0
      %999 = vmatpush2.bf16.msra.mxu0 0
      %1000 = vmatprep.mubr.bf16.mxu0 0
      %1001 = vmatmul.mubr.bf16.gmra.mxu0 %v806
      %v1002 = vpop.f32.mrf.mxu0
      %v1003 = vadd.f32 %v802, %v1002
      %v1004 = vpop.f32.mrf.mxu0
      %v1005 = vadd.f32 %v802, %v1004
      %v1006 = vpop.f32.mrf.mxu0
      %v1007 = vpop.f32.mrf.mxu0
      %1008 = vdwg.mxu0
      %1009 = vmatprep.subr.bf16.mxu0 0
      %1010 = vmatpush1.bf16.msra.mxu0 0
      %1011 = vmatprep.subr.bf16.mxu0 0
      %1012 = vmatpush1.bf16.msra.mxu0 0
      %1013 = vmatprep.subr.bf16.mxu0 0
      %1014 = vmatpush1.bf16.msra.mxu0 0
      %1015 = vmatprep.subr.bf16.mxu0 0
      %1016 = vmatpush1.bf16.msra.mxu0 0
      %1017 = vmatprep.subr.bf16.mxu0 0
      %1018 = vmatpush1.bf16.msra.mxu0 0
      %1019 = vmatprep.subr.bf16.mxu0 0
      %1020 = vmatpush1.bf16.msra.mxu0 0
      %1021 = vmatprep.subr.bf16.mxu0 0
      %1022 = vmatpush1.bf16.msra.mxu0 0
      %1023 = vmatprep.subr.bf16.mxu0 %v837
      %1024 = vmatpush1.bf16.msra.mxu0 %v834
      %1025 = vmatprep.subr.bf16.mxu0 0
      %1026 = vmatpush2.bf16.msra.mxu0 0
      %1027 = vmatprep.subr.bf16.mxu0 0
      %1028 = vmatpush2.bf16.msra.mxu0 0
      %1029 = vmatprep.subr.bf16.mxu0 0
      %1030 = vmatpush2.bf16.msra.mxu0 0
      %1031 = vmatprep.subr.bf16.mxu0 0
      %1032 = vmatpush2.bf16.msra.mxu0 0
      %1033 = vmatprep.subr.bf16.mxu0 0
      %1034 = vmatpush2.bf16.msra.mxu0 0
      %1035 = vmatprep.subr.bf16.mxu0 0
      %1036 = vmatpush2.bf16.msra.mxu0 0
      %1037 = vmatprep.subr.bf16.mxu0 0
      %1038 = vmatpush2.bf16.msra.mxu0 0
      %1039 = vmatprep.subr.bf16.mxu0 0
      %1040 = vmatpush2.bf16.msra.mxu0 0
      %1041 = vmatprep.mubr.bf16.mxu0 0
      %1042 = vmatmul.mubr.bf16.gmra.mxu0 %v806
      %v1043 = vpop.f32.mrf.mxu0
      %v1044 = vadd.f32 %v802, %v1043
      %v1045 = vpop.f32.mrf.mxu0
      %v1046 = vadd.f32 %v802, %v1045
      %v1047 = vpop.f32.mrf.mxu0
      %v1048 = vpop.f32.mrf.mxu0
      %1049 = vdwg.mxu0
      %1050 = vmatprep.subr.bf16.mxu0 0
      %1051 = vmatpush1.bf16.msra.mxu0 0
      %1052 = vmatprep.subr.bf16.mxu0 0
      %1053 = vmatpush1.bf16.msra.mxu0 0
      %1054 = vmatprep.subr.bf16.mxu0 0
      %1055 = vmatpush1.bf16.msra.mxu0 0
      %1056 = vmatprep.subr.bf16.mxu0 0
      %1057 = vmatpush1.bf16.msra.mxu0 0
      %1058 = vmatprep.subr.bf16.mxu0 0
      %1059 = vmatpush1.bf16.msra.mxu0 0
      %1060 = vmatprep.subr.bf16.mxu0 0
      %1061 = vmatpush1.bf16.msra.mxu0 0
      %1062 = vmatprep.subr.bf16.mxu0 0
      %1063 = vmatpush1.bf16.msra.mxu0 0
      %1064 = vmatprep.subr.bf16.mxu0 %v843
      %1065 = vmatpush1.bf16.msra.mxu0 %v840
      %1066 = vmatprep.subr.bf16.mxu0 0
      %1067 = vmatpush2.bf16.msra.mxu0 0
      %1068 = vmatprep.subr.bf16.mxu0 0
      %1069 = vmatpush2.bf16.msra.mxu0 0
      %1070 = vmatprep.subr.bf16.mxu0 0
      %1071 = vmatpush2.bf16.msra.mxu0 0
      %1072 = vmatprep.subr.bf16.mxu0 0
      %1073 = vmatpush2.bf16.msra.mxu0 0
      %1074 = vmatprep.subr.bf16.mxu0 0
      %1075 = vmatpush2.bf16.msra.mxu0 0
      %1076 = vmatprep.subr.bf16.mxu0 0
      %1077 = vmatpush2.bf16.msra.mxu0 0
      %1078 = vmatprep.subr.bf16.mxu0 0
      %1079 = vmatpush2.bf16.msra.mxu0 0
      %1080 = vmatprep.subr.bf16.mxu0 0
      %1081 = vmatpush2.bf16.msra.mxu0 0
      %1082 = vmatprep.mubr.bf16.mxu0 0
      %1083 = vmatmul.mubr.bf16.gmra.mxu0 %v806
      %v1084 = vpop.f32.mrf.mxu0
      %v1085 = vadd.f32 %v802, %v1084
      %v1086 = vpop.f32.mrf.mxu0
      %v1087 = vadd.f32 %v802, %v1086
      %v1088 = vpop.f32.mrf.mxu0
      %v1089 = vpop.f32.mrf.mxu0
      %1090 = vdwg.mxu0
      %v1091 = vmax.f32 %v880, 0.0
      %v1092 = vmax.f32 %v882, 0.0
      %v1093 = vmax.f32 %v921, 0.0
      %v1094 = vmax.f32 %v923, 0.0
      %v1095 = vmax.f32 %v962, 0.0
      %v1096 = vmax.f32 %v964, 0.0
      %v1097 = vmax.f32 %v1003, 0.0
      %v1098 = vmax.f32 %v1005, 0.0
      %v1099 = vmax.f32 %v1044, 0.0
      %v1100 = vmax.f32 %v1046, 0.0
      %v1101 = vmax.f32 %v1085, 0.0
      %v1102 = vmax.f32 %v1087, 0.0
      %v1103 = vmin.f32 %v1091, 6.0
      %v1104 = vmin.f32 %v1092, 6.0
      %v1105 = vmin.f32 %v1093, 6.0
      %v1106 = vmin.f32 %v1094, 6.0
      %v1107 = vmin.f32 %v1095, 6.0
      %v1108 = vmin.f32 %v1096, 6.0
      %v1109 = vmin.f32 %v1097, 6.0
      %v1110 = vmin.f32 %v1098, 6.0
      %v1111 = vmin.f32 %v1099, 6.0
      %v1112 = vmin.f32 %v1100, 6.0
      %v1113 = vmin.f32 %v1101, 6.0
      %v1114 = vmin.f32 %v1102, 6.0
      %1115 = vst [vmem:[%s224] sm:$0xff] %v1103
      %1116 = vst [vmem:[%s224 + $0x8] sm:$0xff] %v1104
      %1117 = vst [vmem:[%s224 + $0x10] sm:$0xff] %v1105
      %1118 = vst [vmem:[%s224 + $0x18] sm:$0xff] %v1106
      %1119 = vst [vmem:[%s224 + $0x20] sm:$0xff] %v1107
      %1120 = vst [vmem:[%s224 + $0x28] sm:$0xff] %v1108
      %1121 = vst [vmem:[%s224 + $0x30] sm:$0xff] %v1109
      %1122 = vst [vmem:[%s224 + $0x38] sm:$0xff] %v1110
      %1123 = vst [vmem:[%s224 + $0x40] sm:$0xff] %v1111
      %1124 = vst [vmem:[%s224 + $0x48] sm:$0xff] %v1112
      %1125 = vst [vmem:[%s224 + $0x50] sm:$0xff] %v1113
      %1126 = vst [vmem:[%s224 + $0x58] sm:$0xff] %v1114
      %p1127 = scmp.lt.s32.totalorder %s16, 1
      %s1128 = scalar_select %p1127, %s16, 1
      %s1129 = smul.addr %s1128, 12
      %s1130 = smul.addr %s1129, 8
      %s1131 = scalar_lea.vmem %s5, %s1130
      // Predicated region
      $region41: #{deconv_block.1} parent=39 // pred_check
        %p1132 = pneg %p144
      $region42: #{deconv_block.1} parent=39 // pred_check_branch
        %1134 = sbr.rel (%p1132) target = $region44
      $region43: #{deconv_block.1} parent=39 // pred_region
        _
      $region44: #{deconv_block.1} parent=39 // pred_fallthru
        _
    $region40: #{deconv_block.1} parent=5 // pred_fallthru
      _
    %p1135 = scmp.le.s32.totalorder 2, %s11
    // Predicated region
    $region45: #{deconv_block.1} parent=5 // pred_check
      %p1136 = pneg %p1135
    $region46: #{deconv_block.1} parent=5 // pred_check_branch
      %1138 = sbr.rel (%p1136) target = $region48
    $region47: #{deconv_block.1} parent=5 // pred_region
      %s1139 = ssub.s32 %s11, 2
      // Predicated region
      $region49: #{deconv_block.1} parent=47 // pred_check
        %p1140 = pneg %p150
      $region50: #{deconv_block.1} parent=47 // pred_check_branch
        %1142 = sbr.rel (%p1140) target = $region52
      $region51: #{deconv_block.1} parent=47 // pred_region
        %p1143 = scmp.lt.s32.totalorder %s17, 1
        %s1144 = scalar_select %p1143, %s17, 1
        %s1145 = smul.addr %s1144, 12
        %s1146 = smul.addr %s1145, 8
        %s1147 = scalar_lea.vmem %s5, %s1146
      $region52: #{deconv_block.1} parent=47 // pred_fallthru
        _
    $region48: #{deconv_block.1} parent=5 // pred_fallthru
      _
  $region6: #{deconv_block.1} parent=0 // loop_footer
    %s15 = sadd.s32 1, %s11
  $region7: #{deconv_block.1} parent=0 // loop_footer_branch
    %10 = sbr.rel target = $region3
  $region8: #{deconv_block.1} parent=0 // loop_exit
    _

</llo_original>
